<compile_context>
chip_gen: v5e
topology: v5e:2x2
jax: 0.10.0
libtpu: 0.0.40
codegen_flags: <defaults>
</compile_context>

<pallas_src>
import functools

import jax
import jax.numpy as jnp
from jax.experimental import pallas as pl
from jax.experimental.pallas import tpu as pltpu


def _round_up(v, m):
    return ((v + m - 1) // m) * m


def vit_head_kernel(x_ref, wt_ref, xs_ref, ws_ref, o_ref):
    # x_ref:  [TB, D]  (compute dtype)  -- raw (un-normalized) batch tile
    # wt_ref: [D, TC]  (compute dtype)  -- raw weight tile, pre-transposed
    # xs_ref: [TB, 1]  f32              -- logit_scale * rsqrt(||x_row||^2)
    # ws_ref: [1, TC]  f32              -- rsqrt(||w_class||^2)
    # o_ref:  [TB, TC] out dtype
    acc = jnp.dot(x_ref[...], wt_ref[...], preferred_element_type=jnp.float32)
    # Epilogue: fold row scale (with logit_scale) and column scale into the
    # [TB, TC] f32 accumulator -- much cheaper than scaling the D-wide operand.
    o_ref[...] = (acc * xs_ref[...] * ws_ref[...]).astype(o_ref.dtype)


def prepare_weight(weight, *, tc=1024, compute_dtype=None):
    """One-time weight preparation (hoist out of the per-call hot path).

    Returns (wt, w_inv, TC):
      wt    : [D, Cp] weight, padded to Cp classes and transposed, compute dtype
      w_inv : [1, Cp] f32 per-class inverse norms
      TC    : class tile size to pass to vit_head_apply (divides Cp)
    """
    C, D = weight.shape
    if compute_dtype is None:
        compute_dtype = weight.dtype

    # Pad classes only to the 128-lane minimum, then pick the largest class
    # tile <= tc that divides Cp (keeps padding waste < 128 classes while
    # keeping the output lane-dense).
    Cp = _round_up(C, 128)
    nlanes = Cp // 128
    best = 1
    for d in range(1, nlanes + 1):
        if nlanes % d == 0 and d * 128 <= tc:
            best = d
    TC = best * 128

    w32 = weight.astype(jnp.float32)
    w_inv = jax.lax.rsqrt(jnp.sum(w32 * w32, axis=-1, keepdims=True))  # [C, 1]
    if Cp != C:
        # ones-padding keeps padded class norms finite; padded cols are sliced
        # off by the caller.
        weight = jnp.pad(weight, ((0, Cp - C), (0, 0)), constant_values=1)
        w_inv = jnp.pad(w_inv, ((0, Cp - C), (0, 0)), constant_values=1)

    wt = jnp.transpose(weight.astype(compute_dtype))  # [D, Cp]
    w_inv = jnp.reshape(w_inv, (1, Cp)).astype(jnp.float32)
    return wt, w_inv, TC


@functools.partial(
    jax.jit, static_argnames=("num_classes", "tc", "tb", "out_dtype"))
def vit_head_apply(x, wt, w_inv, logit_scale, *, num_classes, tc, tb=512,
                   out_dtype=jnp.float32):
    """x: [B, D]; wt/w_inv from prepare_weight; returns [B, num_classes]."""
    B, D = x.shape
    D2, Cp = wt.shape
    assert D == D2 and Cp % tc == 0

    compute_dtype = wt.dtype
    sub = 16 if compute_dtype == jnp.bfloat16 else 8  # bf16 packs 2 rows/sublane

    TB = min(tb, _round_up(B, sub))
    TB = max(sub, (TB // sub) * sub)
    TC = tc

    in_b = jnp.dtype(compute_dtype).itemsize
    out_b = jnp.dtype(out_dtype).itemsize

    def _est(tb_, tc_):
        # Double-buffered per-step VMEM footprint estimate (x, wt, out tiles
        # plus the small [TB,1]/[1,TC] scale vectors, lane/sublane padded).
        return (2 * (tb_ * D + D * tc_) * in_b
                + 2 * tb_ * tc_ * out_b
                + 2 * (tb_ * 128 + 8 * tc_) * 4)

    # Keep the per-step footprint v7x-safe (<= ~24 MiB of its 64 MiB physical
    # VMEM); shrink TC first (still divides Cp), then TB.
    while _est(TB, TC) > (24 << 20):
        if TC % 256 == 0 and TC > 128:
            TC //= 2
        elif TB > sub:
            TB = max(sub, ((TB // 2) // sub) * sub)
        else:
            break

    Bp = _round_up(B, TB)

    # Per-row scale with logit_scale folded in: computed ONCE here, reused for
    # every class tile (instead of once per (c, b) grid step in the kernel).
    scale = jnp.asarray(logit_scale, jnp.float32)
    x32 = x.astype(jnp.float32)
    x_inv = scale * jax.lax.rsqrt(
        jnp.sum(x32 * x32, axis=-1, keepdims=True))               # [B, 1]

    xc = x.astype(compute_dtype)
    if Bp != B:
        # ones-padding keeps values finite; padded rows are sliced off below.
        xc = jnp.pad(xc, ((0, Bp - B), (0, 0)), constant_values=1)
        x_inv = jnp.pad(x_inv, ((0, Bp - B), (0, 0)), constant_values=1)

    nc, nb = Cp // TC, Bp // TB

    est = _est(TB, TC)
    # Raise the scoped-VMEM limit only when the footprint would exceed the
    # conservative defaults (v5e: 16 MiB scoped); cap at v7x physical 64 MiB.
    vmem_limit = None if est < (12 << 20) else min(64 << 20, est + (8 << 20))

    out = pl.pallas_call(
        vit_head_kernel,
        out_shape=jax.ShapeDtypeStruct((Bp, Cp), out_dtype),
        grid_spec=pltpu.PrefetchScalarGridSpec(
            num_scalar_prefetch=0,
            # C tiles outer / B tiles inner: the [D, TC] weight tile's block
            # index is constant over the inner axis (fetched once per class
            # tile); x re-read traffic scales as B*C*D/TC, cut by large TC.
            grid=(nc, nb),
            in_specs=[
                pl.BlockSpec((TB, D), lambda c, b: (b, 0)),   # x tile
                pl.BlockSpec((D, TC), lambda c, b: (0, c)),   # weight tile (pre-T)
                pl.BlockSpec((TB, 1), lambda c, b: (b, 0)),   # row scale (f32)
                pl.BlockSpec((1, TC), lambda c, b: (0, c)),   # class inv-norm (f32)
                # (If profiling on v5e shows exposed x-tile DMA, add
                #  pipeline_mode=pl.Buffered(3) to the x BlockSpec.)
            ],
            out_specs=pl.BlockSpec((TB, TC), lambda c, b: (b, c)),
        ),
        compiler_params=pltpu.CompilerParams(
            # No cross-step carried state: every (c, b) tile is independent, so
            # both axes are parallel and v7x megacore can shard either one.
            dimension_semantics=("parallel", "parallel"),
            vmem_limit_bytes=vmem_limit,
        ),
    )(xc, wt, x_inv, w_inv)

    if Bp != B or Cp != num_classes:
        out = out[:B, :num_classes]
    return out


def vit_head(x, weight, logit_scale, *, tb=512, tc=1024, out_dtype=jnp.float32):
    """One-shot convenience wrapper (prep + apply).

    In production, call prepare_weight() once per weight update and
    vit_head_apply() per batch so the weight pad/transpose/norm is not redone
    every forward call.
    """
    wt, w_inv, tc_used = prepare_weight(weight, tc=tc, compute_dtype=x.dtype)
    return vit_head_apply(x, wt, w_inv, logit_scale,
                          num_classes=weight.shape[0], tc=tc_used, tb=tb,
                          out_dtype=out_dtype)


def vit_head_ref(x, weight, logit_scale):
    xn = x / jnp.linalg.norm(x, axis=-1, keepdims=True)
    wn = weight / jnp.linalg.norm(weight, axis=-1, keepdims=True)
    return logit_scale * (xn @ wn.T)


if __name__ == "__main__":
    key = jax.random.PRNGKey(0)
    k_x, k_w = jax.random.split(key)

    B, D, C = 8, 32, 16  # small test sizes: batch, emb_dim, num_classes

    x = jax.random.normal(k_x, (B, D), dtype=jnp.float32)
    # Deterministic synthetic weight (uniform(-1,1)); rows get unit-normalized
    # inside the forward pass, matching the PyTorch module.
    weight = jax.random.uniform(k_w, (C, D), dtype=jnp.float32,
                                minval=-1.0, maxval=1.0)
    logit_scale = jnp.asarray(1.0 / 0.07, dtype=jnp.float32)

    # One-time weight prep (static parameter), then the per-batch kernel call.
    wt, w_inv, tc_used = prepare_weight(weight, compute_dtype=x.dtype)
    out = vit_head_apply(x, wt, w_inv, logit_scale, num_classes=C, tc=tc_used)
    out = jax.block_until_ready(out)

    ref = vit_head_ref(x, weight, logit_scale)
    assert out.shape == (B, C)
    assert jnp.allclose(out, ref, atol=1e-3, rtol=1e-3), "mismatch vs reference"

    print("KERNEL_OK")
</pallas_src>

<mosaic_0001>
module attributes {stable_mosaic.version = 11 : i64} {
  func.func @vit_head_kernel(%arg0: i32, %arg1: i32, %arg2: memref<8x32xf32, #tpu.memory_space<vmem>>, %arg3: memref<32x128xf32, #tpu.memory_space<vmem>>, %arg4: memref<8x1xf32, #tpu.memory_space<vmem>>, %arg5: memref<1x128xf32, #tpu.memory_space<vmem>>, %arg6: memref<8x128xf32, #tpu.memory_space<vmem>>) attributes {dimension_semantics = [#tpu.dimension_semantics<parallel>, #tpu.dimension_semantics<parallel>], iteration_bounds = array<i64: 1, 1>, scalar_prefetch = 0 : i64, scratch_operands = 0 : i64, tpu.core_type = #tpu.core_type<tc>, window_params = [{transform_indices = @transform_0, window_bounds = array<i64: 8, 32>}, {transform_indices = @transform_1, window_bounds = array<i64: 32, 128>}, {transform_indices = @transform_2, window_bounds = array<i64: 8, 1>}, {transform_indices = @transform_3, window_bounds = array<i64: 1, 128>}, {transform_indices = @transform_4, window_bounds = array<i64: 8, 128>}]} {
    %c0 = arith.constant 0 : index
    %c0_0 = arith.constant 0 : index
    %0 = vector.load %arg2[%c0, %c0_0] : memref<8x32xf32, #tpu.memory_space<vmem>>, vector<8x32xf32>
    %c0_1 = arith.constant 0 : index
    %c0_2 = arith.constant 0 : index
    %1 = vector.load %arg3[%c0_1, %c0_2] : memref<32x128xf32, #tpu.memory_space<vmem>>, vector<32x128xf32>
    %cst = arith.constant dense<0.000000e+00> : vector<8x128xf32>
    %2 = tpu.matmul %0, %1, %cst {dimension_numbers = #tpu.dot_dimension_numbers<[1], [0], [0], [1], [0, 0, 1, 1], [], []>} : vector<8x32xf32>, vector<32x128xf32>, vector<8x128xf32> -> vector<8x128xf32>
    %c0_3 = arith.constant 0 : index
    %c0_4 = arith.constant 0 : index
    %3 = vector.load %arg4[%c0_3, %c0_4] : memref<8x1xf32, #tpu.memory_space<vmem>>, vector<8x1xf32>
    %4 = vector.broadcast %3 : vector<8x1xf32> to vector<8x128xf32>
    %5 = arith.mulf %2, %4 : vector<8x128xf32>
    %c0_5 = arith.constant 0 : index
    %c0_6 = arith.constant 0 : index
    %6 = vector.load %arg5[%c0_5, %c0_6] : memref<1x128xf32, #tpu.memory_space<vmem>>, vector<1x128xf32>
    %7 = vector.broadcast %6 : vector<1x128xf32> to vector<8x128xf32>
    %8 = arith.mulf %5, %7 : vector<8x128xf32>
    %c0_7 = arith.constant 0 : index
    %c0_8 = arith.constant 0 : index
    %9 = vector.load %arg6[%c0_7, %c0_8] : memref<8x128xf32, #tpu.memory_space<vmem>>, vector<8x128xf32>
    tpu.vector_store %arg6[%c0_7, %c0_8], %8 {strides = array<i32>} : memref<8x128xf32, #tpu.memory_space<vmem>>, vector<8x128xf32>,
    return
  }
  func.func @transform_0(%arg0: i32, %arg1: i32) -> (i32, i32) {
    %c0_i32 = arith.constant 0 : i32
    %c0_i32_0 = arith.constant 0 : i32
    return %arg1, %c0_i32 : i32, i32
  }
  func.func @transform_1(%arg0: i32, %arg1: i32) -> (i32, i32) {
    %c0_i32 = arith.constant 0 : i32
    %c0_i32_0 = arith.constant 0 : i32
    return %c0_i32, %arg0 : i32, i32
  }
  func.func @transform_2(%arg0: i32, %arg1: i32) -> (i32, i32) {
    %c0_i32 = arith.constant 0 : i32
    %c0_i32_0 = arith.constant 0 : i32
    return %arg1, %c0_i32 : i32, i32
  }
  func.func @transform_3(%arg0: i32, %arg1: i32) -> (i32, i32) {
    %c0_i32 = arith.constant 0 : i32
    %c0_i32_0 = arith.constant 0 : i32
    return %c0_i32, %arg0 : i32, i32
  }
  func.func @transform_4(%arg0: i32, %arg1: i32) -> (i32, i32) {
    %c0_i32 = arith.constant 0 : i32
    return %arg1, %arg0 : i32, i32
  }
}

</mosaic_0001>

<llo_original>
// kernel: vit_head_apply.1
$region0: #{vit_head_apply.1}
  #allocation0 [shape = 'u32[]', space=smem, size = 0x4, offset = 0x4, fixed_abs, tag = 'smem constant byte address 0x4 - core index']
  #allocation1 [shape = 'u32[72,128]{1,0:T(1,128)}', space=vmem, size = 0x9000, scoped, tag = 'internal scratch']
  %s0 = inlined_call_operand.vmem [shape: f32[8,32], index: 0, kind: input, shape index: {}]
  %s1 = inlined_call_operand.hbm [shape: f32[32,128], index: 1, kind: input, shape index: {}]
  %s2 = inlined_call_operand.vmem [shape: f32[8,1], index: 2, kind: input, shape index: {}]
  %s3 = inlined_call_operand.vmem [shape: f32[1,128], index: 3, kind: input, shape index: {}]
  %s4 = inlined_call_operand.hbm [shape: f32[8,128], index: 4, kind: output, shape index: {}]
  %s5 = sld [smem:[#allocation0]]
  $region30: #{vit_head_apply.1} parent=0
    _
  %s7 = ssub.s32 1, %s5
  %s8 = scalar_select 0, %s7, %s5
  $region1: #{vit_head_apply.1} parent=0
    #allocation2 [shape = 'u8[16384]{0}', space=vmem, size = 0x4000, scoped, tag = 'input window, operand 1, single buffered']
    #allocation3 [shape = 's32[1]{0}', space=sflag, size = 0x4, scoped, tag = 'scoped memory for vit_head_apply.1']
    #allocation4 [shape = 's32[1]{0}', space=sflag, size = 0x4, scoped, tag = 'scoped memory for vit_head_apply.1']
    #allocation5 [shape = 'u8[4096]{0}', space=vmem, size = 0x1000, scoped, tag = 'output window, operand 0, single buffered']
    %9 = vsyncpa [#allocation3], 0
    %10 = vsyncpa [#allocation4], 0
    // Predicated region
    $region2: #{vit_head_apply.1} parent=1 // pred_check
      _
    $region3: #{vit_head_apply.1} parent=1 // pred_check_branch
      %12 = sbr.rel (0) target = $region5
    $region4: #{vit_head_apply.1} parent=1 // pred_region
      _
    $region5: #{vit_head_apply.1} parent=1 // pred_fallthru
      _
    // Predicated region
    $region6: #{vit_head_apply.1} parent=1 // pred_check
      _
    $region7: #{vit_head_apply.1} parent=1 // pred_check_branch
      %14 = sbr.rel (0) target = $region9
    $region8: #{vit_head_apply.1} parent=1 // pred_region
      %16 = vsyncadd [#allocation3], 0
      %s17 = sshll.u32 %s1, 4
      %s18 = int_to_ptr.hbm [resolvable:$true] %s17
      %s19 = sshll.u32 [#allocation2], 4
      %s20 = int_to_ptr.vmem [resolvable:$true] %s19
      %25 = dma.hbm_to_vmem [thread:$0]  %s18, 512, %s20, [#allocation3], 128, 128, 8
    $region9: #{vit_head_apply.1} parent=1 // pred_fallthru
      _
    // Predicated region
    $region10: #{vit_head_apply.1} parent=1 // pred_check
      _
    $region11: #{vit_head_apply.1} parent=1 // pred_check_branch
      %27 = sbr.rel (0) target = $region13
    $region12: #{vit_head_apply.1} parent=1 // pred_region
      _
    $region13: #{vit_head_apply.1} parent=1 // pred_fallthru
      _
    // Predicated region
    $region14: #{vit_head_apply.1} parent=1 // pred_check
      _
    $region15: #{vit_head_apply.1} parent=1 // pred_check_branch
      %29 = sbr.rel (0) target = $region17
    $region16: #{vit_head_apply.1} parent=1 // pred_region
      _
    $region17: #{vit_head_apply.1} parent=1 // pred_fallthru
      _
    // Predicated region
    $region18: #{vit_head_apply.1} parent=1 // pred_check
      _
    $region19: #{vit_head_apply.1} parent=1 // pred_check_branch
      %31 = sbr.rel (0) target = $region21
    $region20: #{vit_head_apply.1} parent=1 // pred_region
      %33 = dma.done [#allocation3], 512
    $region21: #{vit_head_apply.1} parent=1 // pred_fallthru
      _
    %v34 = vld [vmem:[%s0] sm:$0xff]
    %v35 = vld [vmem:[#allocation2] sm:$0xff]
    %v36 = vld [vmem:[#allocation2 + $0x8] sm:$0xff]
    %v37 = vld [vmem:[#allocation2 + $0x10] sm:$0xff]
    %v38 = vld [vmem:[#allocation2 + $0x18] sm:$0xff]
    %vm39 = vcmask 261120
    %v41 = vsel %vm39, %v34, 0
    %43 = vmatpush.msra.mxu0 0.0
    %44 = vmatpush.msra.mxu0 0.0
    %45 = vmatpush.msra.mxu0 0.0
    %46 = vmatpush.msra.mxu0 0.0
    %47 = vmatpush.msra.mxu0 0.0
    %48 = vmatpush.msra.mxu0 0.0
    %49 = vmatpush.msra.mxu0 0.0
    %50 = vmatpush.msra.mxu0 0.0
    %51 = vmatpush.msra.mxu0 0.0
    %52 = vmatpush.msra.mxu0 0.0
    %53 = vmatpush.msra.mxu0 0.0
    %54 = vmatpush.msra.mxu0 0.0
    %55 = vmatpush.msra.mxu0 %v38
    %56 = vmatpush.msra.mxu0 %v37
    %57 = vmatpush.msra.mxu0 %v36
    %58 = vmatpush.msra.mxu0 %v35
    %59 = vmatmul.f32.gmra.mxu0 %v41
    %v60 = vpop.f32.mrf.mxu0
    %v61 = vadd.f32 0.0, %v60
    %62 = vdwg.mxu0
    %v63 = vld [vmem:[%s2] sm:$0xff]
    %65 = vset.pattern.permute.xlu0 0
    %66 = vperm.xlu0 %65, %v63
    %v67 = vpop.permute.xlu0 %66
    %v69 = vmul.f32 %v61, %v67
    %v70 = vld [vmem:[%s3] sm:$0x1]
    %v72 = vperm.slane %v70, 0
    %v74 = vmul.f32 %v69, %v72
    %75 = vst [vmem:[#allocation5] sm:$0xff] %v74
    // Predicated region
    $region22: #{vit_head_apply.1} parent=1 // pred_check
      _
    $region23: #{vit_head_apply.1} parent=1 // pred_check_branch
      %77 = sbr.rel (0) target = $region25
    $region24: #{vit_head_apply.1} parent=1 // pred_region
      %79 = vsyncadd [#allocation4], 0
      %s81 = sshll.u32 [#allocation5], 4
      %s82 = int_to_ptr.vmem [resolvable:$true] %s81
      %s83 = sshll.u32 %s4, 4
      %s84 = int_to_ptr.hbm [resolvable:$true] %s83
      %86 = dma.vmem_to_hbm [thread:$0]  %s82, 128, %s84, [#allocation4]
    $region25: #{vit_head_apply.1} parent=1 // pred_fallthru
      _
    // Predicated region
    $region26: #{vit_head_apply.1} parent=1 // pred_check
      _
    $region27: #{vit_head_apply.1} parent=1 // pred_check_branch
      %88 = sbr.rel (0) target = $region29
    $region28: #{vit_head_apply.1} parent=1 // pred_region
      %90 = dma.done [#allocation4], 128
    $region29: #{vit_head_apply.1} parent=1 // pred_fallthru
      _
    %91 = vsyncpa [#allocation3], 1
    %92 = vsyncpa [#allocation4], 1

</llo_original>
